<compile_context>
chip_gen: v6e
topology: v6e:2x2x1
jax: 0.10.0
libtpu: 0.0.40
codegen_flags: <defaults>
</compile_context>

<pallas_src>
import math

import jax
import jax.numpy as jnp
from jax.experimental import pallas as pl
from jax.experimental.pallas import tpu as pltpu

_SQRT2 = math.sqrt(2.0)

_LANE = 128                      # TPU lane width
_SUBLANE = 8                     # TPU sublane width
_TM_MAX = 2048                   # max rows per grid step
_TN_CAP = 2048                   # max output-feature columns per grid step
_W_BYTES_CAP = 6 * 1024 * 1024   # VMEM budget for one resident weight tile
_ROWS_BYTES_CAP = 12 * 1024 * 1024  # VMEM budget for (x + out) double-buffered tiles


def _gelu_exact(h):
    # PyTorch nn.GELU() default == exact erf formulation.
    return 0.5 * h * (1.0 + jax.lax.erf(h / _SQRT2))


def _round_up(n, m):
    return ((n + m - 1) // m) * m


# ----------------------------------------------------------------------------
# Kernel: out_tile = GELU(x_tile @ w_tile + b_tile)
# ----------------------------------------------------------------------------
def _mlp_kernel(x_ref, w_ref, b_ref, o_ref):
    h = jnp.dot(x_ref[...], w_ref[...], preferred_element_type=jnp.float32)
    h = h + b_ref[...]
    o_ref[...] = _gelu_exact(h).astype(o_ref.dtype)


def mlp_pallas(x, w, b):
    """MLP forward: GELU(x @ w + b).

    x: [..., n_in]  (any number of leading dims)
    w: [n_in, n_out]   (transposed from torch's [n_out, n_in] layout)
    b: [n_out]
    returns: [..., n_out]
    """
    orig_shape = x.shape
    n_in = orig_shape[-1]
    n_out = w.shape[1]
    N = int(math.prod(orig_shape[:-1])) if len(orig_shape) > 1 else 1
    x2d = x.reshape(N, n_in)

    # --- output-feature tiling: lane-dense (multiple of 128), VMEM-bounded ---
    n_out_128 = _round_up(n_out, _LANE)
    tn_cap = min(_TN_CAP, max(_LANE, ((_W_BYTES_CAP // (n_in * 4)) // _LANE) * _LANE))
    if n_out_128 <= tn_cap:
        tn = n_out_128
        n_ct = 1
    else:
        n_ct = -(-n_out_128 // tn_cap)                       # number of col tiles
        tn = _round_up(-(-n_out_128 // n_ct), _LANE)         # balanced tile width
    n_out_p = tn * n_ct
    if n_out_p != n_out:
        w = jnp.pad(w, ((0, 0), (0, n_out_p - n_out)))
        b = jnp.pad(b, ((0, n_out_p - n_out),))
    b2d = b.reshape(1, n_out_p)

    # --- row tiling: as large as the VMEM budget allows ----------------------
    bytes_per_row = 4 * (n_in + tn) * 2   # x tile + out tile, double-buffered
    tm_cap = max(_SUBLANE,
                 min(_TM_MAX, ((_ROWS_BYTES_CAP // bytes_per_row) // _SUBLANE) * _SUBLANE))
    if N >= tm_cap:
        tm = tm_cap
    else:
        tm = _round_up(max(N, 1), _SUBLANE)
    n_rows = _round_up(N, tm)
    if n_rows != N:
        x2d = jnp.pad(x2d, ((0, n_rows - N), (0, 0)))
    n_rt = n_rows // tm

    # Grid: column tiles outer (weight tile stays resident across inner rows),
    # row tiles inner (activations stream).
    grid = (n_ct, n_rt)

    cost = pl.CostEstimate(
        flops=2 * n_rows * n_in * n_out_p,
        transcendentals=n_rows * n_out_p,
        bytes_accessed=4 * (n_ct * n_rows * n_in + n_in * n_out_p + n_out_p
                            + n_rows * n_out_p),
    )

    out = pl.pallas_call(
        _mlp_kernel,
        out_shape=jax.ShapeDtypeStruct((n_rows, n_out_p), x.dtype),
        grid_spec=pltpu.PrefetchScalarGridSpec(
            num_scalar_prefetch=0,
            grid=grid,
            in_specs=[
                pl.BlockSpec((tm, n_in), lambda j, i: (i, 0)),   # streamed rows
                pl.BlockSpec((n_in, tn), lambda j, i: (0, j)),   # resident weight tile
                pl.BlockSpec((1, tn), lambda j, i: (0, j)),      # resident bias tile
            ],
            out_specs=pl.BlockSpec((tm, tn), lambda j, i: (i, j)),
        ),
        compiler_params=pltpu.CompilerParams(
            dimension_semantics=("parallel", "parallel"),
            vmem_limit_bytes=32 * 1024 * 1024,  # safe on v5e/v6e/v7x; budgets above fit
        ),
        cost_estimate=cost,
    )(x2d, w, b2d)

    # strip row / feature padding and restore leading dims
    out = out[:N, :n_out]
    return out.reshape(*orig_shape[:-1], n_out)


# ----------------------------------------------------------------------------
# Parameter init (mirrors torch nn.Linear default init, stored as [n_in, n_out])
# ----------------------------------------------------------------------------
def init_mlp_params(key, n_in, n_out):
    kw, kb = jax.random.split(key)
    bound = 1.0 / math.sqrt(n_in)
    w = jax.random.uniform(kw, (n_in, n_out), jnp.float32, -bound, bound)
    b = jax.random.uniform(kb, (n_out,), jnp.float32, -bound, bound)
    return dict(w=w, b=b)


# Plain-JAX reference for verification (dropout=0 -> identity)
def mlp_ref(params, x):
    h = jnp.einsum("...i,io->...o", x, params["w"]) + params["b"]
    return _gelu_exact(h)


if __name__ == "__main__":
    key = jax.random.PRNGKey(0)
    kx, kx2, kx3, kp, kp3 = jax.random.split(key, 5)

    # Small shapes consistent with the module: batch=2, seq=8, hidden=32 -> n_out=64
    B, L, n_in, n_out = 2, 8, 32, 64
    params = init_mlp_params(kp, n_in, n_out)

    x = jax.random.normal(kx, (B, L, n_in), jnp.float32)
    out = jax.block_until_ready(mlp_pallas(x, params["w"], params["b"]))
    ref = jax.block_until_ready(mlp_ref(params, x))
    assert out.shape == (B, L, n_out)
    assert jnp.allclose(out, ref, atol=1e-5, rtol=1e-5), "mismatch vs reference (small)"

    # Multi-row-tile + row-padding path (N not a tile multiple)
    x2 = jax.random.normal(kx2, (5, 900, n_in), jnp.float32)   # N = 4500 rows
    out2 = jax.block_until_ready(mlp_pallas(x2, params["w"], params["b"]))
    ref2 = jax.block_until_ready(mlp_ref(params, x2))
    assert out2.shape == (5, 900, n_out)
    assert jnp.allclose(out2, ref2, atol=1e-5, rtol=1e-5), "mismatch vs reference (tiled)"

    # Column-tiling path (n_out_p > column-tile cap -> 2 column tiles)
    n_out_big = 2200
    params3 = init_mlp_params(kp3, n_in, n_out_big)
    x3 = jax.random.normal(kx3, (4, 16, n_in), jnp.float32)    # N = 64 rows
    out3 = jax.block_until_ready(mlp_pallas(x3, params3["w"], params3["b"]))
    ref3 = jax.block_until_ready(mlp_ref(params3, x3))
    assert out3.shape == (4, 16, n_out_big)
    assert jnp.allclose(out3, ref3, atol=1e-5, rtol=1e-5), "mismatch vs reference (col-tiled)"

    print("KERNEL_OK")
</pallas_src>

<mosaic_0001>
module attributes {stable_mosaic.version = 11 : i64} {
  func.func @_mlp_kernel(%arg0: i32, %arg1: i32, %arg2: memref<16x32xf32, #tpu.memory_space<vmem>>, %arg3: memref<32x128xf32, #tpu.memory_space<vmem>>, %arg4: memref<1x128xf32, #tpu.memory_space<vmem>>, %arg5: memref<16x128xf32, #tpu.memory_space<vmem>>) attributes {dimension_semantics = [#tpu.dimension_semantics<parallel>, #tpu.dimension_semantics<parallel>], iteration_bounds = array<i64: 1, 1>, scalar_prefetch = 0 : i64, scratch_operands = 0 : i64, tpu.core_type = #tpu.core_type<tc>, window_params = [{transform_indices = @transform_0, window_bounds = array<i64: 16, 32>}, {transform_indices = @transform_1, window_bounds = array<i64: 32, 128>}, {transform_indices = @transform_2, window_bounds = array<i64: 1, 128>}, {transform_indices = @transform_3, window_bounds = array<i64: 16, 128>}]} {
    %c0 = arith.constant 0 : index
    %c0_0 = arith.constant 0 : index
    %0 = vector.load %arg2[%c0, %c0_0] : memref<16x32xf32, #tpu.memory_space<vmem>>, vector<16x32xf32>
    %c0_1 = arith.constant 0 : index
    %c0_2 = arith.constant 0 : index
    %1 = vector.load %arg3[%c0_1, %c0_2] : memref<32x128xf32, #tpu.memory_space<vmem>>, vector<32x128xf32>
    %cst = arith.constant dense<0.000000e+00> : vector<16x128xf32>
    %2 = tpu.matmul %0, %1, %cst {dimension_numbers = #tpu.dot_dimension_numbers<[1], [0], [0], [1], [0, 0, 1, 1], [], []>} : vector<16x32xf32>, vector<32x128xf32>, vector<16x128xf32> -> vector<16x128xf32>
    %c0_3 = arith.constant 0 : index
    %c0_4 = arith.constant 0 : index
    %3 = vector.load %arg4[%c0_3, %c0_4] : memref<1x128xf32, #tpu.memory_space<vmem>>, vector<1x128xf32>
    %4 = vector.broadcast %3 : vector<1x128xf32> to vector<16x128xf32>
    %5 = arith.addf %2, %4 : vector<16x128xf32>
    %cst_5 = arith.constant 5.000000e-01 : f32
    %6 = vector.broadcast %cst_5 : f32 to vector<16x128xf32>
    %7 = arith.mulf %6, %5 : vector<16x128xf32>
    %cst_6 = arith.constant 1.41421354 : f32
    %8 = vector.broadcast %cst_6 : f32 to vector<16x128xf32>
    %9 = arith.divf %5, %8 : vector<16x128xf32>
    %10 = math.erf %9 : vector<16x128xf32>
    %cst_7 = arith.constant 1.000000e+00 : f32
    %11 = vector.broadcast %cst_7 : f32 to vector<16x128xf32>
    %12 = arith.addf %11, %10 : vector<16x128xf32>
    %13 = arith.mulf %7, %12 : vector<16x128xf32>
    %c0_8 = arith.constant 0 : index
    %c0_9 = arith.constant 0 : index
    %14 = vector.load %arg5[%c0_8, %c0_9] : memref<16x128xf32, #tpu.memory_space<vmem>>, vector<16x128xf32>
    tpu.vector_store %arg5[%c0_8, %c0_9], %13 {strides = array<i32>} : memref<16x128xf32, #tpu.memory_space<vmem>>, vector<16x128xf32>,
    return
  }
  func.func @transform_0(%arg0: i32, %arg1: i32) -> (i32, i32) {
    %c0_i32 = arith.constant 0 : i32
    %c0_i32_0 = arith.constant 0 : i32
    return %arg1, %c0_i32 : i32, i32
  }
  func.func @transform_1(%arg0: i32, %arg1: i32) -> (i32, i32) {
    %c0_i32 = arith.constant 0 : i32
    %c0_i32_0 = arith.constant 0 : i32
    return %c0_i32, %arg0 : i32, i32
  }
  func.func @transform_2(%arg0: i32, %arg1: i32) -> (i32, i32) {
    %c0_i32 = arith.constant 0 : i32
    %c0_i32_0 = arith.constant 0 : i32
    return %c0_i32, %arg0 : i32, i32
  }
  func.func @transform_3(%arg0: i32, %arg1: i32) -> (i32, i32) {
    %c0_i32 = arith.constant 0 : i32
    return %arg1, %arg0 : i32, i32
  }
}

</mosaic_0001>

<llo_original>
// kernel: tpu_custom_call.1
$region0: #{tpu_custom_call.1}
  #allocation0 [shape = 'u32[]', space=smem, size = 0x4, offset = 0x4, fixed_abs, tag = 'smem constant byte address 0x4 - core index']
  #allocation1 [shape = 'u32[144,128]{1,0:T(1,128)}', space=vmem, size = 0x12000, scoped, tag = 'internal scratch']
  %s0 = inlined_call_operand.hbm [shape: f32[16,32], index: 0, kind: input, shape index: {}]
  %s1 = inlined_call_operand.hbm [shape: f32[32,128], index: 1, kind: input, shape index: {}]
  %s2 = inlined_call_operand.vmem [shape: f32[1,128], index: 2, kind: input, shape index: {}]
  %s3 = inlined_call_operand.hbm [shape: f32[16,128], index: 3, kind: output, shape index: {}]
  %s4 = sld [smem:[#allocation0]]
  $region30: #{tpu_custom_call.1} parent=0
    _
  %s6 = ssub.s32 1, %s4
  %s7 = scalar_select 0, %s6, %s4
  $region1: #{tpu_custom_call.1} parent=0
    #allocation2 [shape = 'u8[8192]{0}', space=vmem, size = 0x2000, scoped, tag = 'input window, operand 0, single buffered']
    #allocation3 [shape = 's32[1]{0}', space=sflag, size = 0x4, scoped, tag = 'scoped memory for tpu_custom_call.1']
    #allocation4 [shape = 's32[1]{0}', space=sflag, size = 0x4, scoped, tag = 'scoped memory for tpu_custom_call.1']
    #allocation5 [shape = 'u8[16384]{0}', space=vmem, size = 0x4000, scoped, tag = 'input window, operand 1, single buffered']
    #allocation6 [shape = 's32[1]{0}', space=sflag, size = 0x4, scoped, tag = 'scoped memory for tpu_custom_call.1']
    #allocation7 [shape = 'u8[8192]{0}', space=vmem, size = 0x2000, scoped, tag = 'output window, operand 0, single buffered']
    %8 = vsyncpa [#allocation3], 0
    %9 = vsyncpa [#allocation6], 0
    %10 = vsyncpa [#allocation4], 0
    // Predicated region
    $region2: #{tpu_custom_call.1} parent=1 // pred_check
      _
    $region3: #{tpu_custom_call.1} parent=1 // pred_check_branch
      %12 = sbr.rel (0) target = $region5
    $region4: #{tpu_custom_call.1} parent=1 // pred_region
      %s14 = ssub.s32 256, 256
      %15 = vsyncadd [#allocation3], %s14
      %s16 = sshll.u32 [#allocation2], 4
      %s17 = int_to_ptr.vmem [resolvable:$true] %s16
      %22 = dma.hbm_to_vmem [thread:$0]  %s0, 256, %s17, [#allocation3], 128, 128, 8
    $region5: #{tpu_custom_call.1} parent=1 // pred_fallthru
      _
    // Predicated region
    $region6: #{tpu_custom_call.1} parent=1 // pred_check
      _
    $region7: #{tpu_custom_call.1} parent=1 // pred_check_branch
      %24 = sbr.rel (0) target = $region9
    $region8: #{tpu_custom_call.1} parent=1 // pred_region
      %s26 = ssub.s32 512, 512
      %27 = vsyncadd [#allocation6], %s26
      %s28 = sshll.u32 [#allocation5], 4
      %s29 = int_to_ptr.vmem [resolvable:$true] %s28
      %34 = dma.hbm_to_vmem [thread:$0]  %s1, 512, %s29, [#allocation6], 128, 128, 8
    $region9: #{tpu_custom_call.1} parent=1 // pred_fallthru
      _
    // Predicated region
    $region10: #{tpu_custom_call.1} parent=1 // pred_check
      _
    $region11: #{tpu_custom_call.1} parent=1 // pred_check_branch
      %36 = sbr.rel (0) target = $region13
    $region12: #{tpu_custom_call.1} parent=1 // pred_region
      _
    $region13: #{tpu_custom_call.1} parent=1 // pred_fallthru
      _
    // Predicated region
    $region14: #{tpu_custom_call.1} parent=1 // pred_check
      _
    $region15: #{tpu_custom_call.1} parent=1 // pred_check_branch
      %38 = sbr.rel (0) target = $region17
    $region16: #{tpu_custom_call.1} parent=1 // pred_region
      %39 = dma.done [#allocation3], 256
    $region17: #{tpu_custom_call.1} parent=1 // pred_fallthru
      _
    // Predicated region
    $region18: #{tpu_custom_call.1} parent=1 // pred_check
      _
    $region19: #{tpu_custom_call.1} parent=1 // pred_check_branch
      %41 = sbr.rel (0) target = $region21
    $region20: #{tpu_custom_call.1} parent=1 // pred_region
      %42 = dma.done [#allocation6], 512
    $region21: #{tpu_custom_call.1} parent=1 // pred_fallthru
      _
    %v43 = vld [vmem:[#allocation2] sm:$0xff]
    %v44 = vld [vmem:[#allocation2 + $0x8] sm:$0xff]
    %v45 = vld [vmem:[#allocation5] sm:$0xff]
    %v46 = vld [vmem:[#allocation5 + $0x8] sm:$0xff]
    %v47 = vld [vmem:[#allocation5 + $0x10] sm:$0xff]
    %v48 = vld [vmem:[#allocation5 + $0x18] sm:$0xff]
    %v49 = vld [vmem:[%s2] sm:$0x1]
    %v51 = vlaneseq
    %v52 = vshrl.u32 %v51, 7
    %v53 = vsub.s32 0, %v52
    %v54 = vrot.slane %v49, %v53
    %vm56 = vcmask 261120
    %v58 = vsel %vm56, %v43, 0
    %v61 = vsel %vm56, %v44, 0
    %63 = vmatprep.subr.mxu0 0.0
    %64 = vmatpush1.msra.mxu0 0.0
    %65 = vmatprep.subr.mxu0 0.0
    %66 = vmatpush1.msra.mxu0 0.0
    %67 = vmatprep.subr.mxu0 0.0
    %68 = vmatpush1.msra.mxu0 0.0
    %69 = vmatprep.subr.mxu0 0.0
    %70 = vmatpush1.msra.mxu0 0.0
    %71 = vmatprep.subr.mxu0 0.0
    %72 = vmatpush1.msra.mxu0 0.0
    %73 = vmatprep.subr.mxu0 0.0
    %74 = vmatpush1.msra.mxu0 0.0
    %75 = vmatprep.subr.mxu0 0.0
    %76 = vmatpush1.msra.mxu0 0.0
    %77 = vmatprep.subr.mxu0 0.0
    %78 = vmatpush1.msra.mxu0 0.0
    %79 = vmatprep.subr.mxu0 0.0
    %80 = vmatpush1.msra.mxu0 0.0
    %81 = vmatprep.subr.mxu0 0.0
    %82 = vmatpush1.msra.mxu0 0.0
    %83 = vmatprep.subr.mxu0 0.0
    %84 = vmatpush1.msra.mxu0 0.0
    %85 = vmatprep.subr.mxu0 0.0
    %86 = vmatpush1.msra.mxu0 0.0
    %87 = vmatprep.subr.mxu0 0.0
    %88 = vmatpush1.msra.mxu0 %v48
    %89 = vmatprep.subr.mxu0 0.0
    %90 = vmatpush1.msra.mxu0 %v47
    %91 = vmatprep.subr.mxu0 0.0
    %92 = vmatpush1.msra.mxu0 %v46
    %93 = vmatprep.subr.mxu0 0.0
    %94 = vmatpush1.msra.mxu0 %v45
    %95 = vmatprep.subr.mxu0 0.0
    %96 = vmatpush2.msra.mxu0 0.0
    %97 = vmatprep.subr.mxu0 0.0
    %98 = vmatpush2.msra.mxu0 0.0
    %99 = vmatprep.subr.mxu0 0.0
    %100 = vmatpush2.msra.mxu0 0.0
    %101 = vmatprep.subr.mxu0 0.0
    %102 = vmatpush2.msra.mxu0 0.0
    %103 = vmatprep.subr.mxu0 0.0
    %104 = vmatpush2.msra.mxu0 0.0
    %105 = vmatprep.subr.mxu0 0.0
    %106 = vmatpush2.msra.mxu0 0.0
    %107 = vmatprep.subr.mxu0 0.0
    %108 = vmatpush2.msra.mxu0 0.0
    %109 = vmatprep.subr.mxu0 0.0
    %110 = vmatpush2.msra.mxu0 0.0
    %111 = vmatprep.subr.mxu0 0.0
    %112 = vmatpush2.msra.mxu0 0.0
    %113 = vmatprep.subr.mxu0 0.0
    %114 = vmatpush2.msra.mxu0 0.0
    %115 = vmatprep.subr.mxu0 0.0
    %116 = vmatpush2.msra.mxu0 0.0
    %117 = vmatprep.subr.mxu0 0.0
    %118 = vmatpush2.msra.mxu0 0.0
    %119 = vmatprep.subr.mxu0 0.0
    %120 = vmatpush2.msra.mxu0 0.0
    %121 = vmatprep.subr.mxu0 0.0
    %122 = vmatpush2.msra.mxu0 0.0
    %123 = vmatprep.subr.mxu0 0.0
    %124 = vmatpush2.msra.mxu0 0.0
    %125 = vmatprep.subr.mxu0 0.0
    %126 = vmatpush2.msra.mxu0 0.0
    %127 = vmatprep.mubr.f32.mxu0 0.0
    %128 = vmatmul.mubr.f32.gmra.mxu0 %v58
    %v129 = vpop.f32.mrf.mxu0
    %v130 = vadd.f32 %v54, %v129
    %v131 = vpop.f32.mrf.mxu0
    %132 = vmatprep.mubr.f32.mxu0 0.0
    %133 = vmatmul.mubr.f32.gmra.mxu0 %v61
    %v134 = vpop.f32.mrf.mxu0
    %v135 = vadd.f32 %v54, %v134
    %v136 = vpop.f32.mrf.mxu0
    %137 = vdwg.mxu0
    %v138 = vmul.f32 %v130, 0.5
    %v139 = vmul.f32 %v135, 0.5
    %v140 = vrcp.pop 1.4142135
    %v141 = vmul.f32 %v130, %v140
    %v142 = vmul.f32 %v135, %v140
    %v143 = verf.f32.pop %v141
    %v144 = verf.f32.pop %v142
    %v145 = vadd.f32 %v143, 1.0
    %v146 = vadd.f32 %v144, 1.0
    %v147 = vmul.f32 %v138, %v145
    %v148 = vmul.f32 %v139, %v146
    %149 = vst [vmem:[#allocation7] sm:$0xff] %v147
    %150 = vst [vmem:[#allocation7 + $0x8] sm:$0xff] %v148
    // Predicated region
    $region22: #{tpu_custom_call.1} parent=1 // pred_check
      _
    $region23: #{tpu_custom_call.1} parent=1 // pred_check_branch
      %152 = sbr.rel (0) target = $region25
    $region24: #{tpu_custom_call.1} parent=1 // pred_region
      %s154 = ssub.s32 256, 256
      %155 = vsyncadd [#allocation4], %s154
      %s156 = sshll.u32 [#allocation7], 4
      %s157 = int_to_ptr.vmem [resolvable:$true] %s156
      %162 = dma.vmem_to_hbm [thread:$0]  %s157, 256, %s3, [#allocation4], 128, 128, 8
    $region25: #{tpu_custom_call.1} parent=1 // pred_fallthru
      _
    // Predicated region
    $region26: #{tpu_custom_call.1} parent=1 // pred_check
      _
    $region27: #{tpu_custom_call.1} parent=1 // pred_check_branch
      %164 = sbr.rel (0) target = $region29
    $region28: #{tpu_custom_call.1} parent=1 // pred_region
      %165 = dma.done [#allocation4], 256
    $region29: #{tpu_custom_call.1} parent=1 // pred_fallthru
      _
    %166 = vsyncpa [#allocation3], 1
    %167 = vsyncpa [#allocation6], 1
    %168 = vsyncpa [#allocation4], 1

</llo_original>
